<compile_context>
chip_gen: v7x
topology: tpu7x:2x2x1
jax: 0.10.0
libtpu: 0.0.40
codegen_flags: <defaults>
</compile_context>

<pallas_src>
import functools

import jax
import jax.numpy as jnp
from jax import lax
from jax.experimental import pallas as pl
from jax.experimental.pallas import tpu as pltpu

NEW_IMAGE_SIZE = (8, 8)
INPUT_SIZE = NEW_IMAGE_SIZE[0] * NEW_IMAGE_SIZE[1]   # 64
NUM_CLASSES = 4
OUTPUT_SIZE = NUM_CLASSES

LANE_WIDTH = 128        # lane-dense padded output width
_NEG_LARGE = -1e30      # kills padded classes in the softmax (exp -> 0)


def _round_up(n, m):
    return ((n + m - 1) // m) * m


def _one_layer_nn_kernel(x_ref, w_ref, b_ref, o_ref, *, num_classes):
    """Fused Linear + ReLU + Softmax(dim=1) on one (TB, *) batch tile.

    x_ref: (TB, IN)        f32 or bf16
    w_ref: (IN, LANE)      f32 or bf16   (pre-transposed, zero-padded columns)
    b_ref: (1, LANE)       f32           (zero-padded)
    o_ref: (TB, LANE)      f32           (only [:, :num_classes] meaningful)
    """
    x = x_ref[...]
    w = w_ref[...]
    b = b_ref[...]

    # Linear: x @ W_t + b  (MXU matmul, f32 accumulate; RHS already transposed)
    logits = jnp.dot(x, w, preferred_element_type=jnp.float32) + b

    # ReLU (VPU)
    act = jnp.maximum(logits, 0.0)

    # Mask padded output lanes AFTER ReLU, BEFORE exp, so they contribute
    # nothing to the softmax denominator.
    lane_idx = lax.broadcasted_iota(jnp.int32, act.shape, 1)
    act = jnp.where(lane_idx < num_classes, act, _NEG_LARGE)

    # Numerically stable softmax over dim=1 (the num_classes real lanes).
    m = jnp.max(act, axis=1, keepdims=True)
    e = jnp.exp(act - m)
    denom = jnp.sum(e, axis=1, keepdims=True)
    o_ref[...] = e * pl.reciprocal(denom, approx=False)


def one_layer_nn(x, weight, bias, *, batch_tile=512, use_bf16_inputs=False):
    """Runs the fused kernel over the batch with a pipelined batch grid.

    x:      (B, INPUT_SIZE)           float32
    weight: (OUTPUT_SIZE, INPUT_SIZE) float32   (PyTorch nn.Linear layout)
    bias:   (OUTPUT_SIZE,)            float32
    returns (B, OUTPUT_SIZE)          float32 probabilities
    """
    B, in_f = x.shape
    out_f, in_f2 = weight.shape
    assert in_f == in_f2
    assert out_f <= LANE_WIDTH

    # --- parameter layout plumbing (done once, outside the kernel) ---------
    # Pre-transpose to (IN, OUT) and zero-pad OUT -> 128 lanes.
    w_t = jnp.zeros((in_f, LANE_WIDTH), dtype=weight.dtype)
    w_t = w_t.at[:, :out_f].set(weight.T)
    b_p = jnp.zeros((1, LANE_WIDTH), dtype=jnp.float32)
    b_p = b_p.at[:, :out_f].set(bias.astype(jnp.float32))

    # --- batch tiling -------------------------------------------------------
    tb = min(batch_tile, _round_up(B, 8))     # sublane multiple, covers tiny B
    b_pad = _round_up(B, tb)
    if b_pad != B:
        x = jnp.pad(x, ((0, b_pad - B), (0, 0)))
    grid = (b_pad // tb,)

    if use_bf16_inputs:
        # Halves HBM bytes on v6e/v7x; matmul still accumulates in f32.
        x = x.astype(jnp.bfloat16)
        w_t = w_t.astype(jnp.bfloat16)

    kernel = functools.partial(_one_layer_nn_kernel, num_classes=out_f)

    out_padded = pl.pallas_call(
        kernel,
        out_shape=jax.ShapeDtypeStruct((b_pad, LANE_WIDTH), jnp.float32),
        grid=grid,
        in_specs=[
            pl.BlockSpec((tb, in_f), lambda i: (i, 0)),          # batch tile
            pl.BlockSpec((in_f, LANE_WIDTH), lambda i: (0, 0)),  # full weight
            pl.BlockSpec((1, LANE_WIDTH), lambda i: (0, 0)),     # full bias
        ],
        out_specs=pl.BlockSpec((tb, LANE_WIDTH), lambda i: (i, 0)),
        compiler_params=pltpu.CompilerParams(
            dimension_semantics=("parallel",),  # batch tiles across TCs on v7x
        ),
    )(x, w_t, b_p)

    return out_padded[:B, :out_f]


def reference(x, weight, bias):
    """Pure-JAX reference matching the PyTorch forward."""
    logits = x @ weight.T + bias
    act = jnp.maximum(logits, 0.0)
    return jax.nn.softmax(act, axis=1)


if __name__ == "__main__":
    key = jax.random.PRNGKey(0)
    k_x, k_w, k_b, k_x2 = jax.random.split(key, 4)

    # Deterministic init mimicking nn.Linear's uniform(-1/sqrt(in), 1/sqrt(in)).
    bound = 1.0 / (INPUT_SIZE ** 0.5)
    weight = jax.random.uniform(
        k_w, (OUTPUT_SIZE, INPUT_SIZE), minval=-bound, maxval=bound, dtype=jnp.float32
    )
    bias = jax.random.uniform(
        k_b, (OUTPUT_SIZE,), minval=-bound, maxval=bound, dtype=jnp.float32
    )

    # Small primary case.
    batch = 8
    x = jax.random.normal(k_x, (batch, INPUT_SIZE), dtype=jnp.float32)
    out = jax.block_until_ready(one_layer_nn(x, weight, bias))
    ref = reference(x, weight, bias)
    assert out.shape == (batch, OUTPUT_SIZE)
    assert jnp.allclose(out, ref, atol=1e-5, rtol=1e-5)
    assert jnp.allclose(jnp.sum(out, axis=1), jnp.ones(batch), atol=1e-5)

    # Second case exercising batch padding / slicing (B not a multiple of 8).
    batch2 = 50
    x2 = jax.random.normal(k_x2, (batch2, INPUT_SIZE), dtype=jnp.float32)
    out2 = jax.block_until_ready(one_layer_nn(x2, weight, bias))
    ref2 = reference(x2, weight, bias)
    assert out2.shape == (batch2, OUTPUT_SIZE)
    assert jnp.allclose(out2, ref2, atol=1e-5, rtol=1e-5)
    assert jnp.allclose(jnp.sum(out2, axis=1), jnp.ones(batch2), atol=1e-5)

    print("KERNEL_OK")
</pallas_src>

<mosaic_0001>
module attributes {stable_mosaic.version = 11 : i64} {
  func.func @_one_layer_nn_kernel(%arg0: i32, %arg1: memref<8x64xf32, #tpu.memory_space<vmem>>, %arg2: memref<64x128xf32, #tpu.memory_space<vmem>>, %arg3: memref<1x128xf32, #tpu.memory_space<vmem>>, %arg4: memref<8x128xf32, #tpu.memory_space<vmem>>) attributes {dimension_semantics = [#tpu.dimension_semantics<parallel>], iteration_bounds = array<i64: 1>, scalar_prefetch = 0 : i64, scratch_operands = 0 : i64, tpu.core_type = #tpu.core_type<tc>, window_params = [{transform_indices = @transform_0, window_bounds = array<i64: 8, 64>}, {pipeline_mode = #tpu.pipeline_mode<synchronous>, transform_indices = @transform_1, window_bounds = array<i64: 64, 128>}, {pipeline_mode = #tpu.pipeline_mode<synchronous>, transform_indices = @transform_2, window_bounds = array<i64: 1, 128>}, {transform_indices = @transform_3, window_bounds = array<i64: 8, 128>}]} {
    %c0 = arith.constant 0 : index
    %c0_0 = arith.constant 0 : index
    %0 = vector.load %arg1[%c0, %c0_0] : memref<8x64xf32, #tpu.memory_space<vmem>>, vector<8x64xf32>
    %c0_1 = arith.constant 0 : index
    %c0_2 = arith.constant 0 : index
    %1 = vector.load %arg2[%c0_1, %c0_2] : memref<64x128xf32, #tpu.memory_space<vmem>>, vector<64x128xf32>
    %c0_3 = arith.constant 0 : index
    %c0_4 = arith.constant 0 : index
    %2 = vector.load %arg3[%c0_3, %c0_4] : memref<1x128xf32, #tpu.memory_space<vmem>>, vector<1x128xf32>
    %cst = arith.constant dense<0.000000e+00> : vector<8x128xf32>
    %3 = tpu.matmul %0, %1, %cst {dimension_numbers = #tpu.dot_dimension_numbers<[1], [0], [0], [1], [0, 0, 1, 1], [], []>} : vector<8x64xf32>, vector<64x128xf32>, vector<8x128xf32> -> vector<8x128xf32>
    %4 = vector.broadcast %2 : vector<1x128xf32> to vector<8x128xf32>
    %5 = arith.addf %3, %4 : vector<8x128xf32>
    %cst_5 = arith.constant 0.000000e+00 : f32
    %6 = vector.broadcast %cst_5 : f32 to vector<8x128xf32>
    %7 = arith.maximumf %5, %6 : vector<8x128xf32>
    %8 = tpu.iota {dimensions = array<i32: 1>} : vector<8x128xi32>
    %c4_i32 = arith.constant 4 : i32
    %9 = vector.broadcast %c4_i32 : i32 to vector<8x128xi32>
    %10 = arith.cmpi slt, %8, %9 : vector<8x128xi32>
    %cst_6 = arith.constant -1.000000e+30 : f32
    %11 = vector.broadcast %cst_6 : f32 to vector<8x128xf32>
    %12 = arith.select %10, %7, %11 : vector<8x128xi1>, vector<8x128xf32>
    %cst_7 = arith.constant dense<0xFF800000> : vector<8xf32>
    %13 = vector.multi_reduction <maximumf>, %12, %cst_7 [1] : vector<8x128xf32> to vector<8xf32>
    %14 = vector.shape_cast %13 : vector<8xf32> to vector<8x1xf32>
    %15 = vector.broadcast %14 : vector<8x1xf32> to vector<8x128xf32>
    %16 = arith.subf %12, %15 : vector<8x128xf32>
    %17 = math.exp %16 : vector<8x128xf32>
    %cst_8 = arith.constant dense<0.000000e+00> : vector<8xf32>
    %18 = vector.multi_reduction <add>, %17, %cst_8 [1] : vector<8x128xf32> to vector<8xf32>
    %19 = vector.shape_cast %18 : vector<8xf32> to vector<8x1xf32>
    %20 = tpu.reciprocal %19 : vector<8x1xf32> -> vector<8x1xf32>
    %21 = vector.broadcast %20 : vector<8x1xf32> to vector<8x128xf32>
    %22 = arith.mulf %17, %21 : vector<8x128xf32>
    %c0_9 = arith.constant 0 : index
    %c0_10 = arith.constant 0 : index
    %23 = vector.load %arg4[%c0_9, %c0_10] : memref<8x128xf32, #tpu.memory_space<vmem>>, vector<8x128xf32>
    tpu.vector_store %arg4[%c0_9, %c0_10], %22 {strides = array<i32>} : memref<8x128xf32, #tpu.memory_space<vmem>>, vector<8x128xf32>,
    return
  }
  func.func @transform_0(%arg0: i32) -> (i32, i32) {
    %c0_i32 = arith.constant 0 : i32
    %c0_i32_0 = arith.constant 0 : i32
    return %arg0, %c0_i32 : i32, i32
  }
  func.func @transform_1(%arg0: i32) -> (i32, i32) {
    %c0_i32 = arith.constant 0 : i32
    %c0_i32_0 = arith.constant 0 : i32
    %c0_i32_1 = arith.constant 0 : i32
    return %c0_i32, %c0_i32_0 : i32, i32
  }
  func.func @transform_2(%arg0: i32) -> (i32, i32) {
    %c0_i32 = arith.constant 0 : i32
    %c0_i32_0 = arith.constant 0 : i32
    %c0_i32_1 = arith.constant 0 : i32
    return %c0_i32, %c0_i32_0 : i32, i32
  }
  func.func @transform_3(%arg0: i32) -> (i32, i32) {
    %c0_i32 = arith.constant 0 : i32
    %c0_i32_0 = arith.constant 0 : i32
    return %arg0, %c0_i32 : i32, i32
  }
}

</mosaic_0001>

<llo_original>
// kernel: tpu_custom_call.1
$region0: #{tpu_custom_call.1}
  #allocation0 [shape = 'u32[]', space=smem, size = 0x4, offset = 0x4, fixed_abs, tag = 'smem constant byte address 0x4 - core index']
  #allocation1 [shape = 'u32[144,128]{1,0:T(1,128)}', space=vmem, size = 0x12000, scoped, tag = 'internal scratch']
  %s0 = inlined_call_operand.hbm [shape: f32[8,64], index: 0, kind: input, shape index: {}]
  %s1 = inlined_call_operand.hbm [shape: f32[64,128], index: 1, kind: input, shape index: {}]
  %s2 = inlined_call_operand.vmem [shape: f32[1,128], index: 2, kind: input, shape index: {}]
  %s3 = inlined_call_operand.hbm [shape: f32[8,128], index: 3, kind: output, shape index: {}]
  %s4 = sld [smem:[#allocation0]]
  $region30: #{tpu_custom_call.1} parent=0
    _
  %s6 = ssub.s32 1, %s4
  %s7 = scalar_select 0, %s6, %s4
  $region1: #{tpu_custom_call.1} parent=0
    #allocation2 [shape = 'u8[4096]{0}', space=vmem, size = 0x1000, scoped, tag = 'input window, operand 0, single buffered']
    #allocation3 [shape = 's32[1]{0}', space=sflag, size = 0x4, scoped, tag = 'scoped memory for tpu_custom_call.1']
    #allocation4 [shape = 's32[1]{0}', space=sflag, size = 0x4, scoped, tag = 'scoped memory for tpu_custom_call.1']
    #allocation5 [shape = 'u8[32768]{0}', space=vmem, size = 0x8000, scoped, tag = 'input window, operand 1, single buffered']
    #allocation6 [shape = 's32[1]{0}', space=sflag, size = 0x4, scoped, tag = 'scoped memory for tpu_custom_call.1']
    #allocation7 [shape = 'u8[4096]{0}', space=vmem, size = 0x1000, scoped, tag = 'output window, operand 0, single buffered']
    %8 = vsyncpa [#allocation3], 0
    %9 = vsyncpa [#allocation6], 0
    %10 = vsyncpa [#allocation4], 0
    // Predicated region
    $region2: #{tpu_custom_call.1} parent=1 // pred_check
      _
    $region3: #{tpu_custom_call.1} parent=1 // pred_check_branch
      %12 = sbr.rel (0) target = $region5
    $region4: #{tpu_custom_call.1} parent=1 // pred_region
      %s14 = ssub.s32 128, 128
      %15 = vsyncadd [#allocation3], %s14
      %s17 = sshll.u32 [#allocation2], 4
      %s18 = int_to_ptr.vmem [resolvable:$true] %s17
      %20 = dma.hbm_to_vmem [thread:$0]  %s0, 128, %s18, [#allocation3]
    $region5: #{tpu_custom_call.1} parent=1 // pred_fallthru
      _
    // Predicated region
    $region6: #{tpu_custom_call.1} parent=1 // pred_check
      _
    $region7: #{tpu_custom_call.1} parent=1 // pred_check_branch
      %22 = sbr.rel (0) target = $region9
    $region8: #{tpu_custom_call.1} parent=1 // pred_region
      %s24 = ssub.s32 1024, 1024
      %25 = vsyncadd [#allocation6], %s24
      %s26 = sshll.u32 [#allocation5], 4
      %s27 = int_to_ptr.vmem [resolvable:$true] %s26
      %32 = dma.hbm_to_vmem [thread:$0]  %s1, 1024, %s27, [#allocation6], 128, 128, 8
    $region9: #{tpu_custom_call.1} parent=1 // pred_fallthru
      _
    // Predicated region
    $region10: #{tpu_custom_call.1} parent=1 // pred_check
      _
    $region11: #{tpu_custom_call.1} parent=1 // pred_check_branch
      %34 = sbr.rel (0) target = $region13
    $region12: #{tpu_custom_call.1} parent=1 // pred_region
      _
    $region13: #{tpu_custom_call.1} parent=1 // pred_fallthru
      _
    // Predicated region
    $region14: #{tpu_custom_call.1} parent=1 // pred_check
      _
    $region15: #{tpu_custom_call.1} parent=1 // pred_check_branch
      %36 = sbr.rel (0) target = $region17
    $region16: #{tpu_custom_call.1} parent=1 // pred_region
      %37 = dma.done [#allocation3], 128
    $region17: #{tpu_custom_call.1} parent=1 // pred_fallthru
      _
    // Predicated region
    $region18: #{tpu_custom_call.1} parent=1 // pred_check
      _
    $region19: #{tpu_custom_call.1} parent=1 // pred_check_branch
      %39 = sbr.rel (0) target = $region21
    $region20: #{tpu_custom_call.1} parent=1 // pred_region
      %40 = dma.done [#allocation6], 1024
    $region21: #{tpu_custom_call.1} parent=1 // pred_fallthru
      _
    %v41 = vld [vmem:[#allocation2] sm:$0xff]
    %v42 = vld [vmem:[#allocation5] sm:$0xff]
    %v43 = vld [vmem:[#allocation5 + $0x8] sm:$0xff]
    %v44 = vld [vmem:[#allocation5 + $0x10] sm:$0xff]
    %v45 = vld [vmem:[#allocation5 + $0x18] sm:$0xff]
    %v46 = vld [vmem:[#allocation5 + $0x20] sm:$0xff]
    %v47 = vld [vmem:[#allocation5 + $0x28] sm:$0xff]
    %v48 = vld [vmem:[#allocation5 + $0x30] sm:$0xff]
    %v49 = vld [vmem:[#allocation5 + $0x38] sm:$0xff]
    %v50 = vld [vmem:[%s2] sm:$0x1]
    %v52 = vlaneseq
    %v53 = vshrl.u32 %v52, 7
    %v54 = vsub.s32 0, %v53
    %v55 = vrot.slane %v50, %v54
    %vm57 = vcmask 523264
    %v59 = vsel %vm57, %v41, 0
    %61 = vmatprep.subr.mxu0 0.0
    %62 = vmatpush1.msra.mxu0 %v42
    %63 = vmatprep.subr.mxu0 0.0
    %64 = vmatpush1.msra.mxu0 %v43
    %65 = vmatprep.subr.mxu0 0.0
    %66 = vmatpush1.msra.mxu0 %v44
    %67 = vmatprep.subr.mxu0 0.0
    %68 = vmatpush1.msra.mxu0 %v45
    %69 = vmatprep.subr.mxu0 0.0
    %70 = vmatpush1.msra.mxu0 %v46
    %71 = vmatprep.subr.mxu0 0.0
    %72 = vmatpush1.msra.mxu0 %v47
    %73 = vmatprep.subr.mxu0 0.0
    %74 = vmatpush1.msra.mxu0 %v48
    %75 = vmatprep.subr.mxu0 0.0
    %76 = vmatpush1.msra.mxu0 %v49
    %77 = vmatprep.subr.mxu0 0.0
    %78 = vmatpush1.msra.mxu0 0.0
    %79 = vmatprep.subr.mxu0 0.0
    %80 = vmatpush1.msra.mxu0 0.0
    %81 = vmatprep.subr.mxu0 0.0
    %82 = vmatpush1.msra.mxu0 0.0
    %83 = vmatprep.subr.mxu0 0.0
    %84 = vmatpush1.msra.mxu0 0.0
    %85 = vmatprep.subr.mxu0 0.0
    %86 = vmatpush1.msra.mxu0 0.0
    %87 = vmatprep.subr.mxu0 0.0
    %88 = vmatpush1.msra.mxu0 0.0
    %89 = vmatprep.subr.mxu0 0.0
    %90 = vmatpush1.msra.mxu0 0.0
    %91 = vmatprep.subr.mxu0 0.0
    %92 = vmatpush1.msra.mxu0 0.0
    %93 = vmatprep.subr.mxu0 0.0
    %94 = vmatpush1.msra.mxu0 0.0
    %95 = vmatprep.subr.mxu0 0.0
    %96 = vmatpush1.msra.mxu0 0.0
    %97 = vmatprep.subr.mxu0 0.0
    %98 = vmatpush1.msra.mxu0 0.0
    %99 = vmatprep.subr.mxu0 0.0
    %100 = vmatpush1.msra.mxu0 0.0
    %101 = vmatprep.subr.mxu0 0.0
    %102 = vmatpush1.msra.mxu0 0.0
    %103 = vmatprep.subr.mxu0 0.0
    %104 = vmatpush1.msra.mxu0 0.0
    %105 = vmatprep.subr.mxu0 0.0
    %106 = vmatpush1.msra.mxu0 0.0
    %107 = vmatprep.subr.mxu0 0.0
    %108 = vmatpush1.msra.mxu0 0.0
    %109 = vmatprep.subr.mxu0 0.0
    %110 = vmatpush1.msra.mxu0 0.0
    %111 = vmatprep.subr.mxu0 0.0
    %112 = vmatpush1.msra.mxu0 0.0
    %113 = vmatprep.subr.mxu0 0.0
    %114 = vmatpush1.msra.mxu0 0.0
    %115 = vmatprep.subr.mxu0 0.0
    %116 = vmatpush1.msra.mxu0 0.0
    %117 = vmatprep.subr.mxu0 0.0
    %118 = vmatpush1.msra.mxu0 0.0
    %119 = vmatprep.subr.mxu0 0.0
    %120 = vmatpush1.msra.mxu0 0.0
    %121 = vmatprep.subr.mxu0 0.0
    %122 = vmatpush1.msra.mxu0 0.0
    %123 = vmatprep.subr.mxu0 0.0
    %124 = vmatpush1.msra.mxu0 0.0
    %125 = vmatprep.mubr.f32.mxu0 0.0
    %126 = vmatmul.mubr.f32.gmra.mrb[0].mxu0 %v59
    %v127 = vpop.f32.mrb[0].mxu0
    %v128 = vadd.f32 %v55, %v127
    %v129 = vpop.f32.mrb[0].mxu0
    %130 = vdwg.mxu0
    %v131 = vmax.f32 %v128, 0.0
    %v132 = vlaneseq
    %v133 = vand.u32 %v132, 127
    %vm134 = vcmp.lt.s32.totalorder %v133, 4
    %v135 = vsel %vm134, %v131, -1e+30
    %136 = vmax.xlane.f32.xlu0 %v135
    %v137 = vpop.xlane.xlu0 %136
    %v138 = vsub.f32 %v135, %v137
    %v139 = vmul.f32 %v138, 1.442695
    %v140 = vpow.pop %v139
    %141 = vadd.xlane.f32.xlu0 %v140
    %v142 = vpop.xlane.xlu0 %141
    %v143 = vrcp.pop %v142
    %v144 = vmul.f32 %v140, %v143
    %145 = vst [vmem:[#allocation7] sm:$0xff] %v144
    // Predicated region
    $region22: #{tpu_custom_call.1} parent=1 // pred_check
      _
    $region23: #{tpu_custom_call.1} parent=1 // pred_check_branch
      %147 = sbr.rel (0) target = $region25
    $region24: #{tpu_custom_call.1} parent=1 // pred_region
      %s149 = ssub.s32 128, 128
      %150 = vsyncadd [#allocation4], %s149
      %s152 = sshll.u32 [#allocation7], 4
      %s153 = int_to_ptr.vmem [resolvable:$true] %s152
      %155 = dma.vmem_to_hbm [thread:$0]  %s153, 128, %s3, [#allocation4]
    $region25: #{tpu_custom_call.1} parent=1 // pred_fallthru
      _
    // Predicated region
    $region26: #{tpu_custom_call.1} parent=1 // pred_check
      _
    $region27: #{tpu_custom_call.1} parent=1 // pred_check_branch
      %157 = sbr.rel (0) target = $region29
    $region28: #{tpu_custom_call.1} parent=1 // pred_region
      %158 = dma.done [#allocation4], 128
    $region29: #{tpu_custom_call.1} parent=1 // pred_fallthru
      _
    %159 = vsyncpa [#allocation3], 1
    %160 = vsyncpa [#allocation6], 1
    %161 = vsyncpa [#allocation4], 1

</llo_original>
